<compile_context>
chip_gen: v7x
topology: tpu7x:2x2x1
jax: 0.10.0
libtpu: 0.0.40
codegen_flags: <defaults>
</compile_context>

<pallas_src>
import functools
import math

import jax
import jax.numpy as jnp
from jax import lax
from jax.experimental import pallas as pl
from jax.experimental.pallas import tpu as pltpu


def _round_up(n, m):
    return ((n + m - 1) // m) * m


# ---------------------------------------------------------------------------
# Parameter initialization (deterministic, mirrors Ann.initialize_weights):
#   weights: xavier_uniform with gain = 5/3, stored torch-style (out, in)
#   biases : torch.nn.Linear default U(-1/sqrt(fan_in), 1/sqrt(fan_in)), (out, 1)
# ---------------------------------------------------------------------------
def init_ann_params(key, input_size, hidden_sizes, output_size, dtype=jnp.float32):
    sizes = [input_size] + list(hidden_sizes) + [output_size]
    params = []
    gain = 5.0 / 3.0
    for i in range(len(sizes) - 1):
        fan_in, fan_out = sizes[i], sizes[i + 1]
        key, kw, kb = jax.random.split(key, 3)
        bound_w = gain * math.sqrt(6.0 / (fan_in + fan_out))
        w = jax.random.uniform(kw, (fan_out, fan_in), dtype, -bound_w, bound_w)
        bound_b = 1.0 / math.sqrt(fan_in)
        b = jax.random.uniform(kb, (fan_out, 1), dtype, -bound_b, bound_b)
        params.append((w, b))
    return params


# ---------------------------------------------------------------------------
# Pallas kernel: full MLP forward on one batch tile, (features, batch) layout.
# refs = (xT, w0, b0, w1, b1, ..., wL, bL, outT)
#   xT  : (in_features, TB)     w_l : (out_l, in_l)   b_l : (out_l, 1)
#   outT: (out_features, TB)
# The tile is processed in `num_chunks` sub-chunks of `chunk` lanes to keep
# vreg live ranges bounded.
# ---------------------------------------------------------------------------
def _ann_mlp_kernel(num_layers, num_chunks, chunk, *refs):
    x_ref = refs[0]
    o_ref = refs[-1]
    p = refs[1:-1]

    # Tiny weights/biases: load to vregs once per tile, reused across chunks.
    ws = [p[2 * l][...].astype(jnp.float32) for l in range(num_layers)]
    bs = [p[2 * l + 1][...].astype(jnp.float32) for l in range(num_layers)]

    def compute_chunk(start):
        h = x_ref[:, pl.ds(start, chunk)].astype(jnp.float32)   # (in, chunk)
        for layer in range(num_layers):
            z = jnp.dot(ws[layer], h, preferred_element_type=jnp.float32) + bs[layer]
            h = jnp.tanh(z) if layer < num_layers - 1 else z
        o_ref[:, pl.ds(start, chunk)] = h.astype(o_ref.dtype)   # lane-dense store

    if num_chunks == 1:
        compute_chunk(0)
    else:
        def body(j, carry):
            compute_chunk(pl.multiple_of(j * chunk, chunk))
            return carry

        lax.fori_loop(0, num_chunks, body, 0)


# ---------------------------------------------------------------------------
# Primary (relayout-free) API: feature-major in, feature-major out.
# ---------------------------------------------------------------------------
def ann_forward_fm(x_fm, params, *, tile=8192):
    """Ann forward as a Pallas TPU kernel, feature-major layout.

    x_fm   : (in_features, batch)
    params : list of (W (out, in), b (out, 1)) as from init_ann_params
    returns: (out_features, batch)
    """
    num_layers = len(params)
    in_features, batch = x_fm.shape
    out_features = params[-1][0].shape[0]

    # Tile on the lane (batch) axis: force multiple of 128 for the (8,128) rule.
    tile = max(128, _round_up(int(tile), 128))
    padded_min = _round_up(batch, 128)
    tb = min(tile, padded_min)
    # If the whole padded batch would fit in one tile, split into >= 2 tiles so
    # the "parallel" grid axis can shard across v7x's two TensorCores.
    if tb >= padded_min and padded_min >= 256:
        tb = _round_up((padded_min + 1) // 2, 128)
    padded = _round_up(batch, tb)

    if padded != batch:
        x_fm = jnp.pad(x_fm, ((0, 0), (0, padded - batch)))

    # In-kernel sub-chunk of <= 512 lanes (always a multiple of 128 dividing tb).
    chunk = math.gcd(tb, 512)
    num_chunks = tb // chunk

    flat_params = []
    for (w, b) in params:
        flat_params.extend([w, b])

    # Cost estimate so XLA schedules neighbors around the custom call sensibly.
    flops = 2 * padded * sum(int(w.shape[0]) * int(w.shape[1]) for w, _ in params)
    transcendentals = padded * sum(int(w.shape[0]) for w, _ in params[:-1])
    bytes_accessed = 4 * (
        in_features * padded
        + out_features * padded
        + sum(int(w.size) + int(b.size) for w, b in params)
    )

    kernel = functools.partial(_ann_mlp_kernel, num_layers, num_chunks, chunk)

    in_specs = [pl.BlockSpec((in_features, tb), lambda i: (0, i))]
    for (w, b) in params:
        in_specs.append(pl.BlockSpec(w.shape, lambda i: (0, 0)))   # resident weights
        in_specs.append(pl.BlockSpec(b.shape, lambda i: (0, 0)))   # resident biases

    out_fm = pl.pallas_call(
        kernel,
        out_shape=jax.ShapeDtypeStruct((out_features, padded), x_fm.dtype),
        grid=(padded // tb,),
        in_specs=in_specs,
        out_specs=pl.BlockSpec((out_features, tb), lambda i: (0, i)),
        compiler_params=pltpu.CompilerParams(
            dimension_semantics=("parallel",),
        ),
        cost_estimate=pl.CostEstimate(
            flops=flops,
            transcendentals=transcendentals,
            bytes_accessed=bytes_accessed,
        ),
    )(x_fm, *flat_params)

    if padded != batch:
        out_fm = out_fm[:, :batch]
    return out_fm


# ---------------------------------------------------------------------------
# PyTorch-layout compatibility wrapper: (batch, in) -> (batch, out).
# Prefer ann_forward_fm for large PINN batches (no boundary transposes).
# ---------------------------------------------------------------------------
def ann_forward(x, params, *, tile=8192):
    return ann_forward_fm(x.T, params, tile=tile).T


# Pure-JAX reference for correctness checking (batch-major, like the nn.Module).
def ann_forward_ref(x, params):
    h = x
    for i, (w, b) in enumerate(params):
        z = h @ w.T + b[:, 0]
        h = jnp.tanh(z) if i < len(params) - 1 else z
    return h


if __name__ == "__main__":
    # Shapes consistent with e.g. Ann(4, [32, 32], 3).
    input_size, hidden_sizes, output_size = 4, [32, 32], 3

    key = jax.random.PRNGKey(0)
    key, kx, kx2 = jax.random.split(key, 3)
    params = init_ann_params(key, input_size, hidden_sizes, output_size)

    # 1) Small batch, PyTorch-layout API (single grid step, single chunk).
    batch = 8
    x = jax.random.normal(kx, (batch, input_size), dtype=jnp.float32)
    out = jax.block_until_ready(ann_forward(x, params))
    ref = ann_forward_ref(x, params)
    assert out.shape == (batch, output_size)
    assert jnp.allclose(out, ref, atol=1e-5, rtol=1e-5), "Pallas mismatch (small batch)"

    # 2) Larger batch, feature-major API (exercises grid>=2 + in-kernel chunk loop).
    batch2 = 2048
    x2_fm = jax.random.normal(kx2, (input_size, batch2), dtype=jnp.float32)
    out2_fm = jax.block_until_ready(ann_forward_fm(x2_fm, params))
    ref2 = ann_forward_ref(x2_fm.T, params)
    assert out2_fm.shape == (output_size, batch2)
    assert jnp.allclose(out2_fm.T, ref2, atol=1e-5, rtol=1e-5), "Pallas mismatch (large batch)"

    print("KERNEL_OK")
</pallas_src>

<mosaic_0001>
module attributes {stable_mosaic.version = 11 : i64} {
  func.func @_ann_mlp_kernel(%arg0: i32, %arg1: memref<4x128xf32, #tpu.memory_space<vmem>>, %arg2: memref<32x4xf32, #tpu.memory_space<vmem>>, %arg3: memref<32x1xf32, #tpu.memory_space<vmem>>, %arg4: memref<32x32xf32, #tpu.memory_space<vmem>>, %arg5: memref<32x1xf32, #tpu.memory_space<vmem>>, %arg6: memref<3x32xf32, #tpu.memory_space<vmem>>, %arg7: memref<3x1xf32, #tpu.memory_space<vmem>>, %arg8: memref<3x128xf32, #tpu.memory_space<vmem>>) attributes {dimension_semantics = [#tpu.dimension_semantics<parallel>], iteration_bounds = array<i64: 1>, scalar_prefetch = 0 : i64, scratch_operands = 0 : i64, tpu.core_type = #tpu.core_type<tc>, window_params = [{transform_indices = @transform_0, window_bounds = array<i64: 4, 128>}, {pipeline_mode = #tpu.pipeline_mode<synchronous>, transform_indices = @transform_1, window_bounds = array<i64: 32, 4>}, {pipeline_mode = #tpu.pipeline_mode<synchronous>, transform_indices = @transform_2, window_bounds = array<i64: 32, 1>}, {pipeline_mode = #tpu.pipeline_mode<synchronous>, transform_indices = @transform_3, window_bounds = array<i64: 32, 32>}, {pipeline_mode = #tpu.pipeline_mode<synchronous>, transform_indices = @transform_4, window_bounds = array<i64: 32, 1>}, {pipeline_mode = #tpu.pipeline_mode<synchronous>, transform_indices = @transform_5, window_bounds = array<i64: 3, 32>}, {pipeline_mode = #tpu.pipeline_mode<synchronous>, transform_indices = @transform_6, window_bounds = array<i64: 3, 1>}, {transform_indices = @transform_7, window_bounds = array<i64: 3, 128>}]} {
    %c0 = arith.constant 0 : index
    %c0_0 = arith.constant 0 : index
    %0 = vector.load %arg2[%c0, %c0_0] : memref<32x4xf32, #tpu.memory_space<vmem>>, vector<32x4xf32>
    %c0_1 = arith.constant 0 : index
    %c0_2 = arith.constant 0 : index
    %1 = vector.load %arg4[%c0_1, %c0_2] : memref<32x32xf32, #tpu.memory_space<vmem>>, vector<32x32xf32>
    %c0_3 = arith.constant 0 : index
    %c0_4 = arith.constant 0 : index
    %2 = vector.load %arg6[%c0_3, %c0_4] : memref<3x32xf32, #tpu.memory_space<vmem>>, vector<3x32xf32>
    %c0_5 = arith.constant 0 : index
    %c0_6 = arith.constant 0 : index
    %3 = vector.load %arg3[%c0_5, %c0_6] : memref<32x1xf32, #tpu.memory_space<vmem>>, vector<32x1xf32>
    %c0_7 = arith.constant 0 : index
    %c0_8 = arith.constant 0 : index
    %4 = vector.load %arg5[%c0_7, %c0_8] : memref<32x1xf32, #tpu.memory_space<vmem>>, vector<32x1xf32>
    %c0_9 = arith.constant 0 : index
    %c0_10 = arith.constant 0 : index
    %5 = vector.load %arg7[%c0_9, %c0_10] : memref<3x1xf32, #tpu.memory_space<vmem>>, vector<3x1xf32>
    %c0_11 = arith.constant 0 : index
    %c0_12 = arith.constant 0 : index
    %6 = vector.load %arg1[%c0_11, %c0_12] : memref<4x128xf32, #tpu.memory_space<vmem>>, vector<4x128xf32>
    %cst = arith.constant dense<0.000000e+00> : vector<32x128xf32>
    %7 = tpu.matmul %0, %6, %cst {dimension_numbers = #tpu.dot_dimension_numbers<[1], [0], [0], [1], [0, 0, 1, 1], [], []>} : vector<32x4xf32>, vector<4x128xf32>, vector<32x128xf32> -> vector<32x128xf32>
    %8 = vector.broadcast %3 : vector<32x1xf32> to vector<32x128xf32>
    %9 = arith.addf %7, %8 : vector<32x128xf32>
    %10 = math.tanh %9 : vector<32x128xf32>
    %cst_13 = arith.constant dense<0.000000e+00> : vector<32x128xf32>
    %11 = tpu.matmul %1, %10, %cst_13 {dimension_numbers = #tpu.dot_dimension_numbers<[1], [0], [0], [1], [0, 0, 1, 1], [], []>} : vector<32x32xf32>, vector<32x128xf32>, vector<32x128xf32> -> vector<32x128xf32>
    %12 = vector.broadcast %4 : vector<32x1xf32> to vector<32x128xf32>
    %13 = arith.addf %11, %12 : vector<32x128xf32>
    %14 = math.tanh %13 : vector<32x128xf32>
    %cst_14 = arith.constant dense<0.000000e+00> : vector<3x128xf32>
    %15 = tpu.matmul %2, %14, %cst_14 {dimension_numbers = #tpu.dot_dimension_numbers<[1], [0], [0], [1], [0, 0, 1, 1], [], []>} : vector<3x32xf32>, vector<32x128xf32>, vector<3x128xf32> -> vector<3x128xf32>
    %16 = vector.broadcast %5 : vector<3x1xf32> to vector<3x128xf32>
    %17 = arith.addf %15, %16 : vector<3x128xf32>
    %c0_15 = arith.constant 0 : index
    %c0_16 = arith.constant 0 : index
    %18 = vector.load %arg8[%c0_15, %c0_16] : memref<3x128xf32, #tpu.memory_space<vmem>>, vector<3x128xf32>
    tpu.vector_store %arg8[%c0_15, %c0_16], %17 {strides = array<i32>} : memref<3x128xf32, #tpu.memory_space<vmem>>, vector<3x128xf32>,
    return
  }
  func.func @transform_0(%arg0: i32) -> (i32, i32) {
    %c0_i32 = arith.constant 0 : i32
    %c0_i32_0 = arith.constant 0 : i32
    return %c0_i32, %arg0 : i32, i32
  }
  func.func @transform_1(%arg0: i32) -> (i32, i32) {
    %c0_i32 = arith.constant 0 : i32
    %c0_i32_0 = arith.constant 0 : i32
    %c0_i32_1 = arith.constant 0 : i32
    return %c0_i32, %c0_i32_0 : i32, i32
  }
  func.func @transform_2(%arg0: i32) -> (i32, i32) {
    %c0_i32 = arith.constant 0 : i32
    %c0_i32_0 = arith.constant 0 : i32
    %c0_i32_1 = arith.constant 0 : i32
    return %c0_i32, %c0_i32_0 : i32, i32
  }
  func.func @transform_3(%arg0: i32) -> (i32, i32) {
    %c0_i32 = arith.constant 0 : i32
    %c0_i32_0 = arith.constant 0 : i32
    %c0_i32_1 = arith.constant 0 : i32
    return %c0_i32, %c0_i32_0 : i32, i32
  }
  func.func @transform_4(%arg0: i32) -> (i32, i32) {
    %c0_i32 = arith.constant 0 : i32
    %c0_i32_0 = arith.constant 0 : i32
    %c0_i32_1 = arith.constant 0 : i32
    return %c0_i32, %c0_i32_0 : i32, i32
  }
  func.func @transform_5(%arg0: i32) -> (i32, i32) {
    %c0_i32 = arith.constant 0 : i32
    %c0_i32_0 = arith.constant 0 : i32
    %c0_i32_1 = arith.constant 0 : i32
    return %c0_i32, %c0_i32_0 : i32, i32
  }
  func.func @transform_6(%arg0: i32) -> (i32, i32) {
    %c0_i32 = arith.constant 0 : i32
    %c0_i32_0 = arith.constant 0 : i32
    %c0_i32_1 = arith.constant 0 : i32
    return %c0_i32, %c0_i32_0 : i32, i32
  }
  func.func @transform_7(%arg0: i32) -> (i32, i32) {
    %c0_i32 = arith.constant 0 : i32
    %c0_i32_0 = arith.constant 0 : i32
    return %c0_i32, %arg0 : i32, i32
  }
}

</mosaic_0001>

<llo_original>
// kernel: tpu_custom_call.1
$region0: #{tpu_custom_call.1}
  #allocation0 [shape = 'u32[]', space=smem, size = 0x4, offset = 0x4, fixed_abs, tag = 'smem constant byte address 0x4 - core index']
  #allocation1 [shape = 'u32[144,128]{1,0:T(1,128)}', space=vmem, size = 0x12000, scoped, tag = 'internal scratch']
  %s0 = inlined_call_operand.vmem [shape: f32[4,128], index: 0, kind: input, shape index: {}]
  %s1 = inlined_call_operand.vmem [shape: f32[32,4], index: 1, kind: input, shape index: {}]
  %s2 = inlined_call_operand.vmem [shape: f32[32,1], index: 2, kind: input, shape index: {}]
  %s3 = inlined_call_operand.vmem [shape: f32[32,32], index: 3, kind: input, shape index: {}]
  %s4 = inlined_call_operand.vmem [shape: f32[32,1], index: 4, kind: input, shape index: {}]
  %s5 = inlined_call_operand.vmem [shape: f32[3,32], index: 5, kind: input, shape index: {}]
  %s6 = inlined_call_operand.vmem [shape: f32[3,1], index: 6, kind: input, shape index: {}]
  %s7 = inlined_call_operand.hbm [shape: f32[3,128], index: 7, kind: output, shape index: {}]
  %s8 = sld [smem:[#allocation0]]
  $region38: #{tpu_custom_call.1} parent=0
    _
  %s10 = ssub.s32 1, %s8
  %s11 = scalar_select 0, %s10, %s8
  $region1: #{tpu_custom_call.1} parent=0
    #allocation2 [shape = 'u8[2048]{0}', space=vmem, size = 0x800, scoped, tag = 'output window, operand 0, single buffered']
    #allocation3 [shape = 's32[1]{0}', space=sflag, size = 0x4, scoped, tag = 'scoped memory for tpu_custom_call.1']
    %12 = vsyncpa [#allocation3], 0
    // Predicated region
    $region2: #{tpu_custom_call.1} parent=1 // pred_check
      _
    $region3: #{tpu_custom_call.1} parent=1 // pred_check_branch
      %14 = sbr.rel (0) target = $region5
    $region4: #{tpu_custom_call.1} parent=1 // pred_region
      _
    $region5: #{tpu_custom_call.1} parent=1 // pred_fallthru
      _
    // Predicated region
    $region6: #{tpu_custom_call.1} parent=1 // pred_check
      _
    $region7: #{tpu_custom_call.1} parent=1 // pred_check_branch
      %16 = sbr.rel (0) target = $region9
    $region8: #{tpu_custom_call.1} parent=1 // pred_region
      _
    $region9: #{tpu_custom_call.1} parent=1 // pred_fallthru
      _
    // Predicated region
    $region10: #{tpu_custom_call.1} parent=1 // pred_check
      _
    $region11: #{tpu_custom_call.1} parent=1 // pred_check_branch
      %18 = sbr.rel (0) target = $region13
    $region12: #{tpu_custom_call.1} parent=1 // pred_region
      _
    $region13: #{tpu_custom_call.1} parent=1 // pred_fallthru
      _
    // Predicated region
    $region14: #{tpu_custom_call.1} parent=1 // pred_check
      _
    $region15: #{tpu_custom_call.1} parent=1 // pred_check_branch
      %20 = sbr.rel (0) target = $region17
    $region16: #{tpu_custom_call.1} parent=1 // pred_region
      _
    $region17: #{tpu_custom_call.1} parent=1 // pred_fallthru
      _
    // Predicated region
    $region18: #{tpu_custom_call.1} parent=1 // pred_check
      _
    $region19: #{tpu_custom_call.1} parent=1 // pred_check_branch
      %22 = sbr.rel (0) target = $region21
    $region20: #{tpu_custom_call.1} parent=1 // pred_region
      _
    $region21: #{tpu_custom_call.1} parent=1 // pred_fallthru
      _
    // Predicated region
    $region22: #{tpu_custom_call.1} parent=1 // pred_check
      _
    $region23: #{tpu_custom_call.1} parent=1 // pred_check_branch
      %24 = sbr.rel (0) target = $region25
    $region24: #{tpu_custom_call.1} parent=1 // pred_region
      _
    $region25: #{tpu_custom_call.1} parent=1 // pred_fallthru
      _
    // Predicated region
    $region26: #{tpu_custom_call.1} parent=1 // pred_check
      _
    $region27: #{tpu_custom_call.1} parent=1 // pred_check_branch
      %26 = sbr.rel (0) target = $region29
    $region28: #{tpu_custom_call.1} parent=1 // pred_region
      _
    $region29: #{tpu_custom_call.1} parent=1 // pred_fallthru
      _
    %v27 = vld [vmem:[%s1] sm:$0xff]
    %v28 = vld [vmem:[%s1 + $0x8] sm:$0xff]
    %v29 = vld [vmem:[%s1 + $0x10] sm:$0xff]
    %v30 = vld [vmem:[%s1 + $0x18] sm:$0xff]
    %v31 = vld [vmem:[%s3] sm:$0xff]
    %v32 = vld [vmem:[%s3 + $0x8] sm:$0xff]
    %v33 = vld [vmem:[%s3 + $0x10] sm:$0xff]
    %v34 = vld [vmem:[%s3 + $0x18] sm:$0xff]
    %v35 = vld [vmem:[%s5] sm:$0x7]
    %v36 = vld [vmem:[%s2] sm:$0xff]
    %v37 = vld [vmem:[%s2 + $0x8] sm:$0xff]
    %v38 = vld [vmem:[%s2 + $0x10] sm:$0xff]
    %v39 = vld [vmem:[%s2 + $0x18] sm:$0xff]
    %v40 = vld [vmem:[%s4] sm:$0xff]
    %v41 = vld [vmem:[%s4 + $0x8] sm:$0xff]
    %v42 = vld [vmem:[%s4 + $0x10] sm:$0xff]
    %v43 = vld [vmem:[%s4 + $0x18] sm:$0xff]
    %v44 = vld [vmem:[%s6] sm:$0x7]
    %v45 = vld [vmem:[%s0] sm:$0xf]
    %47 = vset.pattern.permute.xlu0 0
    %48 = vperm.xlu0 %47, %v36
    %v49 = vpop.permute.xlu0 %48
    %52 = vset.pattern.permute.xlu0 0
    %53 = vperm.xlu0 %52, %v37
    %v54 = vpop.permute.xlu0 %53
    %57 = vset.pattern.permute.xlu0 0
    %58 = vperm.xlu0 %57, %v38
    %v59 = vpop.permute.xlu0 %58
    %62 = vset.pattern.permute.xlu0 0
    %63 = vperm.xlu0 %62, %v39
    %v64 = vpop.permute.xlu0 %63
    %vm66 = vcmask 31744
    %v68 = vsel %vm66, %v27, 0
    %v71 = vsel %vm66, %v28, 0
    %v74 = vsel %vm66, %v29, 0
    %v77 = vsel %vm66, %v30, 0
    %vm79 = vcmask 1043456
    %v81 = vsel %vm79, %v45, 0
    %83 = vmatprep.subr.mxu0 0.0
    %84 = vmatpush1.msra.mxu0 %v81
    %85 = vmatprep.subr.mxu0 0.0
    %86 = vmatpush1.msra.mxu0 0.0
    %87 = vmatprep.subr.mxu0 0.0
    %88 = vmatpush1.msra.mxu0 0.0
    %89 = vmatprep.subr.mxu0 0.0
    %90 = vmatpush1.msra.mxu0 0.0
    %91 = vmatprep.subr.mxu0 0.0
    %92 = vmatpush1.msra.mxu0 0.0
    %93 = vmatprep.subr.mxu0 0.0
    %94 = vmatpush1.msra.mxu0 0.0
    %95 = vmatprep.subr.mxu0 0.0
    %96 = vmatpush1.msra.mxu0 0.0
    %97 = vmatprep.subr.mxu0 0.0
    %98 = vmatpush1.msra.mxu0 0.0
    %99 = vmatprep.subr.mxu0 0.0
    %100 = vmatpush1.msra.mxu0 0.0
    %101 = vmatprep.subr.mxu0 0.0
    %102 = vmatpush1.msra.mxu0 0.0
    %103 = vmatprep.subr.mxu0 0.0
    %104 = vmatpush1.msra.mxu0 0.0
    %105 = vmatprep.subr.mxu0 0.0
    %106 = vmatpush1.msra.mxu0 0.0
    %107 = vmatprep.subr.mxu0 0.0
    %108 = vmatpush1.msra.mxu0 0.0
    %109 = vmatprep.subr.mxu0 0.0
    %110 = vmatpush1.msra.mxu0 0.0
    %111 = vmatprep.subr.mxu0 0.0
    %112 = vmatpush1.msra.mxu0 0.0
    %113 = vmatprep.subr.mxu0 0.0
    %114 = vmatpush1.msra.mxu0 0.0
    %115 = vmatprep.subr.mxu0 0.0
    %116 = vmatpush1.msra.mxu0 0.0
    %117 = vmatprep.subr.mxu0 0.0
    %118 = vmatpush1.msra.mxu0 0.0
    %119 = vmatprep.subr.mxu0 0.0
    %120 = vmatpush1.msra.mxu0 0.0
    %121 = vmatprep.subr.mxu0 0.0
    %122 = vmatpush1.msra.mxu0 0.0
    %123 = vmatprep.subr.mxu0 0.0
    %124 = vmatpush1.msra.mxu0 0.0
    %125 = vmatprep.subr.mxu0 0.0
    %126 = vmatpush1.msra.mxu0 0.0
    %127 = vmatprep.subr.mxu0 0.0
    %128 = vmatpush1.msra.mxu0 0.0
    %129 = vmatprep.subr.mxu0 0.0
    %130 = vmatpush1.msra.mxu0 0.0
    %131 = vmatprep.subr.mxu0 0.0
    %132 = vmatpush1.msra.mxu0 0.0
    %133 = vmatprep.subr.mxu0 0.0
    %134 = vmatpush1.msra.mxu0 0.0
    %135 = vmatprep.subr.mxu0 0.0
    %136 = vmatpush1.msra.mxu0 0.0
    %137 = vmatprep.subr.mxu0 0.0
    %138 = vmatpush1.msra.mxu0 0.0
    %139 = vmatprep.subr.mxu0 0.0
    %140 = vmatpush1.msra.mxu0 0.0
    %141 = vmatprep.subr.mxu0 0.0
    %142 = vmatpush1.msra.mxu0 0.0
    %143 = vmatprep.subr.mxu0 0.0
    %144 = vmatpush1.msra.mxu0 0.0
    %145 = vmatprep.subr.mxu0 0.0
    %146 = vmatpush1.msra.mxu0 0.0
    %147 = vmatprep.mubr.f32.mxu0 0.0
    %148 = vmatmul.mubr.f32.gmra.mrb[0].mxu0 %v68
    %v149 = vpop.f32.mrb[0].mxu0
    %v150 = vadd.f32 %v49, %v149
    %v151 = vpop.f32.mrb[0].mxu0
    %152 = vmatprep.mubr.f32.mxu0 0.0
    %153 = vmatmul.mubr.f32.gmra.mrb[0].mxu0 %v71
    %v154 = vpop.f32.mrb[0].mxu0
    %v155 = vadd.f32 %v54, %v154
    %v156 = vpop.f32.mrb[0].mxu0
    %157 = vmatprep.mubr.f32.mxu0 0.0
    %158 = vmatmul.mubr.f32.gmra.mrb[0].mxu0 %v74
    %v159 = vpop.f32.mrb[0].mxu0
    %v160 = vadd.f32 %v59, %v159
    %v161 = vpop.f32.mrb[0].mxu0
    %162 = vmatprep.mubr.f32.mxu0 0.0
    %163 = vmatmul.mubr.f32.gmra.mrb[0].mxu0 %v77
    %v164 = vpop.f32.mrb[0].mxu0
    %v165 = vadd.f32 %v64, %v164
    %v166 = vpop.f32.mrb[0].mxu0
    %167 = vdwg.mxu0
    %v168 = vtanh.pop %v150
    %v169 = vtanh.pop %v155
    %v170 = vtanh.pop %v160
    %v171 = vtanh.pop %v165
    %173 = vset.pattern.permute.xlu0 0
    %174 = vperm.xlu0 %173, %v40
    %v175 = vpop.permute.xlu0 %174
    %178 = vset.pattern.permute.xlu0 0
    %179 = vperm.xlu0 %178, %v41
    %v180 = vpop.permute.xlu0 %179
    %183 = vset.pattern.permute.xlu0 0
    %184 = vperm.xlu0 %183, %v42
    %v185 = vpop.permute.xlu0 %184
    %188 = vset.pattern.permute.xlu0 0
    %189 = vperm.xlu0 %188, %v43
    %v190 = vpop.permute.xlu0 %189
    %vm192 = vcmask 261120
    %v194 = vsel %vm192, %v31, 0
    %v197 = vsel %vm192, %v32, 0
    %v200 = vsel %vm192, %v33, 0
    %v203 = vsel %vm192, %v34, 0
    %205 = vmatprep.subr.mxu0 0.0
    %206 = vmatpush1.msra.mxu0 %v168
    %207 = vmatprep.subr.mxu0 0.0
    %208 = vmatpush1.msra.mxu0 %v169
    %209 = vmatprep.subr.mxu0 0.0
    %210 = vmatpush1.msra.mxu0 %v170
    %211 = vmatprep.subr.mxu0 0.0
    %212 = vmatpush1.msra.mxu0 %v171
    %213 = vmatprep.subr.mxu0 0.0
    %214 = vmatpush1.msra.mxu0 0.0
    %215 = vmatprep.subr.mxu0 0.0
    %216 = vmatpush1.msra.mxu0 0.0
    %217 = vmatprep.subr.mxu0 0.0
    %218 = vmatpush1.msra.mxu0 0.0
    %219 = vmatprep.subr.mxu0 0.0
    %220 = vmatpush1.msra.mxu0 0.0
    %221 = vmatprep.subr.mxu0 0.0
    %222 = vmatpush1.msra.mxu0 0.0
    %223 = vmatprep.subr.mxu0 0.0
    %224 = vmatpush1.msra.mxu0 0.0
    %225 = vmatprep.subr.mxu0 0.0
    %226 = vmatpush1.msra.mxu0 0.0
    %227 = vmatprep.subr.mxu0 0.0
    %228 = vmatpush1.msra.mxu0 0.0
    %229 = vmatprep.subr.mxu0 0.0
    %230 = vmatpush1.msra.mxu0 0.0
    %231 = vmatprep.subr.mxu0 0.0
    %232 = vmatpush1.msra.mxu0 0.0
    %233 = vmatprep.subr.mxu0 0.0
    %234 = vmatpush1.msra.mxu0 0.0
    %235 = vmatprep.subr.mxu0 0.0
    %236 = vmatpush1.msra.mxu0 0.0
    %237 = vmatprep.subr.mxu0 0.0
    %238 = vmatpush1.msra.mxu0 0.0
    %239 = vmatprep.subr.mxu0 0.0
    %240 = vmatpush1.msra.mxu0 0.0
    %241 = vmatprep.subr.mxu0 0.0
    %242 = vmatpush1.msra.mxu0 0.0
    %243 = vmatprep.subr.mxu0 0.0
    %244 = vmatpush1.msra.mxu0 0.0
    %245 = vmatprep.subr.mxu0 0.0
    %246 = vmatpush1.msra.mxu0 0.0
    %247 = vmatprep.subr.mxu0 0.0
    %248 = vmatpush1.msra.mxu0 0.0
    %249 = vmatprep.subr.mxu0 0.0
    %250 = vmatpush1.msra.mxu0 0.0
    %251 = vmatprep.subr.mxu0 0.0
    %252 = vmatpush1.msra.mxu0 0.0
    %253 = vmatprep.subr.mxu0 0.0
    %254 = vmatpush1.msra.mxu0 0.0
    %255 = vmatprep.subr.mxu0 0.0
    %256 = vmatpush1.msra.mxu0 0.0
    %257 = vmatprep.subr.mxu0 0.0
    %258 = vmatpush1.msra.mxu0 0.0
    %259 = vmatprep.subr.mxu0 0.0
    %260 = vmatpush1.msra.mxu0 0.0
    %261 = vmatprep.subr.mxu0 0.0
    %262 = vmatpush1.msra.mxu0 0.0
    %263 = vmatprep.subr.mxu0 0.0
    %264 = vmatpush1.msra.mxu0 0.0
    %265 = vmatprep.subr.mxu0 0.0
    %266 = vmatpush1.msra.mxu0 0.0
    %267 = vmatprep.subr.mxu0 0.0
    %268 = vmatpush1.msra.mxu0 0.0
    %269 = vmatprep.mubr.f32.mxu0 0.0
    %270 = vmatmul.mubr.f32.gmra.mrb[0].mxu0 %v194
    %v271 = vpop.f32.mrb[0].mxu0
    %v272 = vadd.f32 %v175, %v271
    %v273 = vpop.f32.mrb[0].mxu0
    %274 = vmatprep.mubr.f32.mxu0 0.0
    %275 = vmatmul.mubr.f32.gmra.mrb[0].mxu0 %v197
    %v276 = vpop.f32.mrb[0].mxu0
    %v277 = vadd.f32 %v180, %v276
    %v278 = vpop.f32.mrb[0].mxu0
    %279 = vmatprep.mubr.f32.mxu0 0.0
    %280 = vmatmul.mubr.f32.gmra.mrb[0].mxu0 %v200
    %v281 = vpop.f32.mrb[0].mxu0
    %v282 = vadd.f32 %v185, %v281
    %v283 = vpop.f32.mrb[0].mxu0
    %284 = vmatprep.mubr.f32.mxu0 0.0
    %285 = vmatmul.mubr.f32.gmra.mrb[0].mxu0 %v203
    %v286 = vpop.f32.mrb[0].mxu0
    %v287 = vadd.f32 %v190, %v286
    %v288 = vpop.f32.mrb[0].mxu0
    %289 = vdwg.mxu0
    %v290 = vtanh.pop %v272
    %v291 = vtanh.pop %v277
    %v292 = vtanh.pop %v282
    %v293 = vtanh.pop %v287
    %295 = vset.pattern.permute.xlu0 0
    %296 = vperm.xlu0 %295, %v44
    %v297 = vpop.permute.xlu0 %296
    %v300 = vsel %vm192, %v35, 0
    %302 = vmatprep.subr.mxu0 0.0
    %303 = vmatpush1.msra.mxu0 %v290
    %304 = vmatprep.subr.mxu0 0.0
    %305 = vmatpush1.msra.mxu0 %v291
    %306 = vmatprep.subr.mxu0 0.0
    %307 = vmatpush1.msra.mxu0 %v292
    %308 = vmatprep.subr.mxu0 0.0
    %309 = vmatpush1.msra.mxu0 %v293
    %310 = vmatprep.subr.mxu0 0.0
    %311 = vmatpush1.msra.mxu0 0.0
    %312 = vmatprep.subr.mxu0 0.0
    %313 = vmatpush1.msra.mxu0 0.0
    %314 = vmatprep.subr.mxu0 0.0
    %315 = vmatpush1.msra.mxu0 0.0
    %316 = vmatprep.subr.mxu0 0.0
    %317 = vmatpush1.msra.mxu0 0.0
    %318 = vmatprep.subr.mxu0 0.0
    %319 = vmatpush1.msra.mxu0 0.0
    %320 = vmatprep.subr.mxu0 0.0
    %321 = vmatpush1.msra.mxu0 0.0
    %322 = vmatprep.subr.mxu0 0.0
    %323 = vmatpush1.msra.mxu0 0.0
    %324 = vmatprep.subr.mxu0 0.0
    %325 = vmatpush1.msra.mxu0 0.0
    %326 = vmatprep.subr.mxu0 0.0
    %327 = vmatpush1.msra.mxu0 0.0
    %328 = vmatprep.subr.mxu0 0.0
    %329 = vmatpush1.msra.mxu0 0.0
    %330 = vmatprep.subr.mxu0 0.0
    %331 = vmatpush1.msra.mxu0 0.0
    %332 = vmatprep.subr.mxu0 0.0
    %333 = vmatpush1.msra.mxu0 0.0
    %334 = vmatprep.subr.mxu0 0.0
    %335 = vmatpush1.msra.mxu0 0.0
    %336 = vmatprep.subr.mxu0 0.0
    %337 = vmatpush1.msra.mxu0 0.0
    %338 = vmatprep.subr.mxu0 0.0
    %339 = vmatpush1.msra.mxu0 0.0
    %340 = vmatprep.subr.mxu0 0.0
    %341 = vmatpush1.msra.mxu0 0.0
    %342 = vmatprep.subr.mxu0 0.0
    %343 = vmatpush1.msra.mxu0 0.0
    %344 = vmatprep.subr.mxu0 0.0
    %345 = vmatpush1.msra.mxu0 0.0
    %346 = vmatprep.subr.mxu0 0.0
    %347 = vmatpush1.msra.mxu0 0.0
    %348 = vmatprep.subr.mxu0 0.0
    %349 = vmatpush1.msra.mxu0 0.0
    %350 = vmatprep.subr.mxu0 0.0
    %351 = vmatpush1.msra.mxu0 0.0
    %352 = vmatprep.subr.mxu0 0.0
    %353 = vmatpush1.msra.mxu0 0.0
    %354 = vmatprep.subr.mxu0 0.0
    %355 = vmatpush1.msra.mxu0 0.0
    %356 = vmatprep.subr.mxu0 0.0
    %357 = vmatpush1.msra.mxu0 0.0
    %358 = vmatprep.subr.mxu0 0.0
    %359 = vmatpush1.msra.mxu0 0.0
    %360 = vmatprep.subr.mxu0 0.0
    %361 = vmatpush1.msra.mxu0 0.0
    %362 = vmatprep.subr.mxu0 0.0
    %363 = vmatpush1.msra.mxu0 0.0
    %364 = vmatprep.subr.mxu0 0.0
    %365 = vmatpush1.msra.mxu0 0.0
    %366 = vmatprep.mubr.f32.mxu0 0.0
    %367 = vmatmul.mubr.f32.gmra.mrb[0].mxu0 %v300
    %v368 = vpop.f32.mrb[0].mxu0
    %v369 = vadd.f32 %v297, %v368
    %v370 = vpop.f32.mrb[0].mxu0
    %371 = vdwg.mxu0
    %372 = vst [vmem:[#allocation2] sm:$0x7] %v369
    // Predicated region
    $region30: #{tpu_custom_call.1} parent=1 // pred_check
      _
    $region31: #{tpu_custom_call.1} parent=1 // pred_check_branch
      %374 = sbr.rel (0) target = $region33
    $region32: #{tpu_custom_call.1} parent=1 // pred_region
      %s376 = ssub.s32 64, 64
      %377 = vsyncadd [#allocation3], %s376
      %s379 = sshll.u32 [#allocation2], 4
      %s380 = int_to_ptr.vmem [resolvable:$true] %s379
      %382 = dma.vmem_to_hbm [thread:$0]  %s380, 64, %s7, [#allocation3]
    $region33: #{tpu_custom_call.1} parent=1 // pred_fallthru
      _
    // Predicated region
    $region34: #{tpu_custom_call.1} parent=1 // pred_check
      _
    $region35: #{tpu_custom_call.1} parent=1 // pred_check_branch
      %384 = sbr.rel (0) target = $region37
    $region36: #{tpu_custom_call.1} parent=1 // pred_region
      %385 = dma.done [#allocation3], 64
    $region37: #{tpu_custom_call.1} parent=1 // pred_fallthru
      _
    %386 = vsyncpa [#allocation3], 1

</llo_original>
